<compile_context>
chip_gen: v7x
topology: tpu7x:2x2x1
jax: 0.10.0
libtpu: 0.0.40
codegen_flags: <defaults>
</compile_context>

<pallas_src>
import jax
import jax.numpy as jnp
from jax.experimental import pallas as pl
from jax.experimental.pallas import tpu as pltpu

_LANES = 128
_SUBLANES = 8

# VMEM budget for the per-step working set (double-buffered x + double-buffered
# output blocks; weight / accumulator scratch are tiny).  24 MiB of working set
# plus slop stays well under the 48 MiB scoped limit we request, which itself
# leaves headroom on v7x's 64 MiB physical VMEM (v5e/v6e have 128 MiB physical).
_WORKSET_BUDGET_BYTES = 24 * 1024 * 1024
_VMEM_LIMIT_BYTES = 48 * 1024 * 1024
_ROWS_CAP = 16384                 # max rows per grid step (batch rows / lane-rows)
_SPLIT_BATCH_THRESHOLD = 2048     # force grid >= 2 above this (v7x 2nd TensorCore)


def _round_up(x, m):
    return (x + m - 1) // m * m


def _cdiv(a, b):
    return -(-a // b)


def _pick_tile(n, cap, gran, min_grid):
    """Pick (tile, grid): tile % gran == 0, tile <= ~cap, tile * grid >= n.

    min_grid=2 guarantees at least two grid steps so that a "parallel" batch
    axis gives both v7x TensorCores work.
    """
    n_g = _round_up(max(n, 1), gran)
    cap_g = max(cap // gran * gran, gran)
    grid = max(min_grid, _cdiv(n_g, cap_g))
    grid = max(1, min(grid, n_g // gran))      # at least one gran-row per step
    tile = _round_up(_cdiv(n_g, grid), gran)
    grid = _cdiv(n_g, tile)
    return tile, grid


# ---------------------------------------------------------------------------
# Small-K path: K < 128 and 128 % K == 0 (e.g. in_size = 1, 2, 4, ..., 64).
# ---------------------------------------------------------------------------
def _packed_kernel(x_ref, w_ref, o_ref):
    # x_ref: (tr, 128)  -- F = 128//K consecutive batch rows packed per lane-row
    #                      (lane-dense: no 128/K vreg inflation on VPU/VMEM).
    # w_ref: (128, F)   -- block-diagonal weight (kron(eye(F), w)); resident.
    # Segmented K-lane reduction expressed as a matmul on the otherwise idle MXU.
    acc = jnp.dot(x_ref[...], w_ref[...], preferred_element_type=jnp.float32)
    o_ref[...] = jnp.maximum(acc, 0.0).astype(o_ref.dtype)


def _linear_relu_small_k(x, w, B, K, out_dtype, min_grid):
    itemsize = jnp.dtype(x.dtype).itemsize
    out_itemsize = jnp.dtype(out_dtype).itemsize
    F = _LANES // K
    rows_needed = _cdiv(B, F)

    # Honest VMEM accounting per lane-row: 2 x-buffers (128 lanes dense) plus
    # 2 output buffers, whose (tr, F) blocks are lane-padded to 128 in VMEM.
    bytes_per_row = 2 * _LANES * itemsize + 2 * _LANES * out_itemsize
    rows_cap = min(_ROWS_CAP, _WORKSET_BUDGET_BYTES // bytes_per_row)
    tr, grid_b = _pick_tile(rows_needed, rows_cap, _SUBLANES, min_grid)
    rows_pad = tr * grid_b
    b_pad = rows_pad * F

    x_pad = x if b_pad == B else jnp.pad(x, ((0, b_pad - B), (0, 0)))
    x2 = x_pad.reshape(rows_pad, _LANES)          # contiguous (free) reshape
    # (128, F) block-diagonal weight: column f holds w at lanes [f*K, (f+1)*K).
    w_blk = jnp.kron(jnp.eye(F, dtype=jnp.float32),
                     w.astype(jnp.float32).reshape(K, 1)).astype(x.dtype)

    out = pl.pallas_call(
        _packed_kernel,
        out_shape=jax.ShapeDtypeStruct((rows_pad, F), out_dtype),
        grid_spec=pltpu.PrefetchScalarGridSpec(
            num_scalar_prefetch=0,
            grid=(grid_b,),
            in_specs=[
                # TODO(synk): sweep pipeline_mode=pl.Buffered(3) on v7x once
                # tiles are fixed (DMA per step is short there).
                pl.BlockSpec((tr, _LANES), lambda i: (i, 0)),   # packed batch tile
                pl.BlockSpec((_LANES, F), lambda i: (0, 0)),    # weight (resident)
            ],
            out_specs=pl.BlockSpec((tr, F), lambda i: (i, 0)),
        ),
        compiler_params=pltpu.CompilerParams(
            dimension_semantics=("parallel",),
            vmem_limit_bytes=_VMEM_LIMIT_BYTES,
        ),
        cost_estimate=pl.CostEstimate(
            flops=2 * b_pad * K,
            bytes_accessed=itemsize * (b_pad * K + _LANES * F) + b_pad * out_itemsize,
            transcendentals=0,
        ),
    )(x2, w_blk)

    # Row-major flatten of (rows_pad, F) is already batch order.
    return out.reshape(b_pad)[:B].reshape(B, 1)


# ---------------------------------------------------------------------------
# General path: any K, with a K-reduction grid axis when K is large.
# ---------------------------------------------------------------------------
def _general_kernel(x_ref, w_ref, o_ref, acc_ref):
    # x_ref: (r, 128, tk); w_ref: (1, 1, tk); acc_ref: (r, 128) f32 scratch.
    # N=1 matvec: VPU multiply + XLU cross-lane reduce on slots that are idle
    # in this HBM-bound op (MXU would only add fill/drain latency).
    k = pl.program_id(1)

    @pl.when(k == 0)
    def _():
        acc_ref[...] = jnp.zeros_like(acc_ref)

    prod = x_ref[...].astype(jnp.float32) * w_ref[...].astype(jnp.float32)
    acc_ref[...] += jnp.sum(prod, axis=-1)

    @pl.when(k == pl.num_programs(1) - 1)
    def _():
        o_ref[...] = jnp.maximum(acc_ref[...], 0.0).astype(o_ref.dtype)


def _linear_relu_general(x, w, B, K, out_dtype, min_grid):
    itemsize = jnp.dtype(x.dtype).itemsize
    out_itemsize = jnp.dtype(out_dtype).itemsize

    # Feature tiling: single full-K block when small enough, else K grid axis.
    k_pad_full = _round_up(K, _LANES)
    if k_pad_full <= 1024:
        tk, grid_k, k_arr = K, 1, K            # full-dim block, no K padding needed
        tk_vmem = k_pad_full                   # lane-padded footprint in VMEM
    else:
        k_arr = k_pad_full
        tk = next(c for c in (2048, 1024, 512, 256, _LANES) if k_arr % c == 0)
        grid_k = k_arr // tk
        tk_vmem = tk

    # Honest VMEM accounting per batch row (lane padding included):
    # 2 x-buffers + 2 output buffers + 1 f32 accumulator element.
    bytes_per_batch_row = 2 * tk_vmem * itemsize + 2 * out_itemsize + 4
    tm_cap = min(_ROWS_CAP, _WORKSET_BUDGET_BYTES // bytes_per_batch_row)
    tm_cap = max(tm_cap // _LANES * _LANES, _LANES)

    if min_grid == 1 and B <= tm_cap:
        tm = _round_up(B, _LANES)              # single step; block == full sublane dim
        grid_b = 1
    else:
        # Multi-step: tm multiple of 1024 so the (tm//128, 128) output block
        # keeps its sublane dim a multiple of 8.
        tm, grid_b = _pick_tile(B, tm_cap, _SUBLANES * _LANES, min_grid)
    b_pad = tm * grid_b
    r = tm // _LANES

    x_pad = x
    if b_pad != B or k_arr != K:
        # TODO(synk): K-padding copies x once through HBM; only hit when K > 1024
        # and K is not a multiple of 128.
        x_pad = jnp.pad(x, ((0, b_pad - B), (0, k_arr - K)))
    x3 = x_pad.reshape(b_pad // _LANES, _LANES, k_arr)
    w3 = (w if k_arr == K else jnp.pad(w, ((0, 0), (0, k_arr - K)))).reshape(1, 1, k_arr)

    out2d = pl.pallas_call(
        _general_kernel,
        out_shape=jax.ShapeDtypeStruct((b_pad // _LANES, _LANES), out_dtype),
        grid_spec=pltpu.PrefetchScalarGridSpec(
            num_scalar_prefetch=0,
            grid=(grid_b, grid_k),             # reduction axis last
            in_specs=[
                pl.BlockSpec((r, _LANES, tk), lambda i, k: (i, 0, k)),  # batch tile
                pl.BlockSpec((1, 1, tk), lambda i, k: (0, 0, k)),       # weight slice
            ],
            out_specs=pl.BlockSpec((r, _LANES), lambda i, k: (i, 0)),   # lane-dense
            scratch_shapes=[pltpu.VMEM((r, _LANES), jnp.float32)],
        ),
        compiler_params=pltpu.CompilerParams(
            dimension_semantics=("parallel", "arbitrary"),
            vmem_limit_bytes=_VMEM_LIMIT_BYTES,
        ),
        cost_estimate=pl.CostEstimate(
            flops=2 * b_pad * k_arr,
            bytes_accessed=itemsize * (b_pad * k_arr + k_arr) + b_pad * out_itemsize,
            transcendentals=0,
        ),
    )(x3, w3)

    return out2d.reshape(b_pad)[:B].reshape(B, 1)


def linear_relu(x, weight, *, cast_inputs_to_bf16=False):
    """relu(x @ weight.T).  x: (B, K), weight: (1, K) -> (B, 1)."""
    B, K = x.shape
    assert weight.shape == (1, K), weight.shape
    out_dtype = x.dtype

    if cast_inputs_to_bf16:
        # HBM-read-bound kernel: halving x bytes ~2x wall clock; reduction stays
        # f32 inside the kernel.  Off by default (not bit-exact vs torch f32).
        x = x.astype(jnp.bfloat16)
        weight = weight.astype(jnp.bfloat16)
    else:
        weight = weight.astype(x.dtype)

    min_grid = 2 if B > _SPLIT_BATCH_THRESHOLD else 1

    if K < _LANES and _LANES % K == 0:
        return _linear_relu_small_k(x, weight, B, K, out_dtype, min_grid)
    return _linear_relu_general(x, weight, B, K, out_dtype, min_grid)


if __name__ == "__main__":
    key = jax.random.PRNGKey(0)
    kx, kw = jax.random.split(key)

    batch, in_size = 8, 32

    x = jax.random.normal(kx, (batch, in_size), dtype=jnp.float32)
    # torch nn.Linear init: U(-1/sqrt(in), 1/sqrt(in)); weight shape (1, in_size).
    bound = 1.0 / jnp.sqrt(jnp.float32(in_size))
    w = jax.random.uniform(kw, (1, in_size), dtype=jnp.float32,
                           minval=-bound, maxval=bound)

    out = linear_relu(x, w)
    jax.block_until_ready(out)
    ref = jnp.maximum(x @ w.T, 0.0)
    assert out.shape == (batch, 1), out.shape
    assert jnp.allclose(out, ref, atol=1e-5, rtol=1e-5)

    # Exercise the general (unpacked / accumulator) path at a modest shape too.
    x2 = jax.random.normal(kx, (16, 192), dtype=jnp.float32)
    w2 = jax.random.uniform(kw, (1, 192), dtype=jnp.float32, minval=-0.1, maxval=0.1)
    out2 = linear_relu(x2, w2)
    jax.block_until_ready(out2)
    ref2 = jnp.maximum(x2 @ w2.T, 0.0)
    assert out2.shape == (16, 1), out2.shape
    assert jnp.allclose(out2, ref2, atol=1e-5, rtol=1e-5)

    print("KERNEL_OK")
</pallas_src>

<mosaic_0001>
module attributes {stable_mosaic.version = 11 : i64} {
  func.func @_packed_kernel(%arg0: i32, %arg1: memref<8x128xf32, #tpu.memory_space<vmem>>, %arg2: memref<128x4xf32, #tpu.memory_space<vmem>>, %arg3: memref<8x4xf32, #tpu.memory_space<vmem>>) attributes {dimension_semantics = [#tpu.dimension_semantics<parallel>], iteration_bounds = array<i64: 1>, scalar_prefetch = 0 : i64, scratch_operands = 0 : i64, tpu.core_type = #tpu.core_type<tc>, window_params = [{transform_indices = @transform_0, window_bounds = array<i64: 8, 128>}, {pipeline_mode = #tpu.pipeline_mode<synchronous>, transform_indices = @transform_1, window_bounds = array<i64: 128, 4>}, {transform_indices = @transform_2, window_bounds = array<i64: 8, 4>}]} {
    %c0 = arith.constant 0 : index
    %c0_0 = arith.constant 0 : index
    %0 = vector.load %arg1[%c0, %c0_0] : memref<8x128xf32, #tpu.memory_space<vmem>>, vector<8x128xf32>
    %c0_1 = arith.constant 0 : index
    %c0_2 = arith.constant 0 : index
    %1 = vector.load %arg2[%c0_1, %c0_2] : memref<128x4xf32, #tpu.memory_space<vmem>>, vector<128x4xf32>
    %cst = arith.constant dense<0.000000e+00> : vector<8x4xf32>
    %2 = tpu.matmul %0, %1, %cst {dimension_numbers = #tpu.dot_dimension_numbers<[1], [0], [0], [1], [0, 0, 1, 1], [], []>} : vector<8x128xf32>, vector<128x4xf32>, vector<8x4xf32> -> vector<8x4xf32>
    %cst_3 = arith.constant 0.000000e+00 : f32
    %3 = vector.broadcast %cst_3 : f32 to vector<8x4xf32>
    %4 = arith.maximumf %2, %3 : vector<8x4xf32>
    %c0_4 = arith.constant 0 : index
    %c0_5 = arith.constant 0 : index
    %5 = vector.load %arg3[%c0_4, %c0_5] : memref<8x4xf32, #tpu.memory_space<vmem>>, vector<8x4xf32>
    tpu.vector_store %arg3[%c0_4, %c0_5], %4 {strides = array<i32>} : memref<8x4xf32, #tpu.memory_space<vmem>>, vector<8x4xf32>,
    return
  }
  func.func @transform_0(%arg0: i32) -> (i32, i32) {
    %c0_i32 = arith.constant 0 : i32
    %c0_i32_0 = arith.constant 0 : i32
    return %arg0, %c0_i32 : i32, i32
  }
  func.func @transform_1(%arg0: i32) -> (i32, i32) {
    %c0_i32 = arith.constant 0 : i32
    %c0_i32_0 = arith.constant 0 : i32
    %c0_i32_1 = arith.constant 0 : i32
    return %c0_i32, %c0_i32_0 : i32, i32
  }
  func.func @transform_2(%arg0: i32) -> (i32, i32) {
    %c0_i32 = arith.constant 0 : i32
    %c0_i32_0 = arith.constant 0 : i32
    return %arg0, %c0_i32 : i32, i32
  }
}

</mosaic_0001>

<llo_original>
// kernel: tpu_custom_call.1
$region0: #{tpu_custom_call.1}
  #allocation0 [shape = 'u32[]', space=smem, size = 0x4, offset = 0x4, fixed_abs, tag = 'smem constant byte address 0x4 - core index']
  #allocation1 [shape = 'u32[144,128]{1,0:T(1,128)}', space=vmem, size = 0x12000, scoped, tag = 'internal scratch']
  %s0 = inlined_call_operand.vmem [shape: f32[8,128], index: 0, kind: input, shape index: {}]
  %s1 = inlined_call_operand.vmem [shape: f32[128,4], index: 1, kind: input, shape index: {}]
  %s2 = inlined_call_operand.vmem [shape: f32[8,4], index: 2, kind: output, shape index: {}]
  %s3 = sld [smem:[#allocation0]]
  $region18: #{tpu_custom_call.1} parent=0
    _
  %s5 = ssub.s32 1, %s3
  %s6 = scalar_select 0, %s5, %s3
  // Predicated region
  $region2: #{tpu_custom_call.1} parent=0 // pred_check
    _
  $region3: #{tpu_custom_call.1} parent=0 // pred_check_branch
    %8 = sbr.rel (0) target = $region5
  $region4: #{tpu_custom_call.1} parent=0 // pred_region
    _
  $region5: #{tpu_custom_call.1} parent=0 // pred_fallthru
    _
  // Predicated region
  $region6: #{tpu_custom_call.1} parent=0 // pred_check
    _
  $region7: #{tpu_custom_call.1} parent=0 // pred_check_branch
    %10 = sbr.rel (0) target = $region9
  $region8: #{tpu_custom_call.1} parent=0 // pred_region
    _
  $region9: #{tpu_custom_call.1} parent=0 // pred_fallthru
    _
  %v11 = vld [vmem:[%s0] sm:$0xff]
  %v12 = vld [vmem:[%s1] sm:$0xff]
  %v13 = vld [vmem:[%s1 + $0x8] sm:$0xff]
  %v14 = vld [vmem:[%s1 + $0x10] sm:$0xff]
  %v15 = vld [vmem:[%s1 + $0x18] sm:$0xff]
  %v16 = vld [vmem:[%s1 + $0x20] sm:$0xff]
  %v17 = vld [vmem:[%s1 + $0x28] sm:$0xff]
  %v18 = vld [vmem:[%s1 + $0x30] sm:$0xff]
  %v19 = vld [vmem:[%s1 + $0x38] sm:$0xff]
  %v20 = vld [vmem:[%s1 + $0x40] sm:$0xff]
  %v21 = vld [vmem:[%s1 + $0x48] sm:$0xff]
  %v22 = vld [vmem:[%s1 + $0x50] sm:$0xff]
  %v23 = vld [vmem:[%s1 + $0x58] sm:$0xff]
  %v24 = vld [vmem:[%s1 + $0x60] sm:$0xff]
  %v25 = vld [vmem:[%s1 + $0x68] sm:$0xff]
  %v26 = vld [vmem:[%s1 + $0x70] sm:$0xff]
  %v27 = vld [vmem:[%s1 + $0x78] sm:$0xff]
  %28 = vmatprep.subr.mxu0 0.0
  %29 = vmatpush1.msra.mxu0 %v12
  %30 = vmatprep.subr.mxu0 0.0
  %31 = vmatpush1.msra.mxu0 %v13
  %32 = vmatprep.subr.mxu0 0.0
  %33 = vmatpush1.msra.mxu0 %v14
  %34 = vmatprep.subr.mxu0 0.0
  %35 = vmatpush1.msra.mxu0 %v15
  %36 = vmatprep.subr.mxu0 0.0
  %37 = vmatpush1.msra.mxu0 %v16
  %38 = vmatprep.subr.mxu0 0.0
  %39 = vmatpush1.msra.mxu0 %v17
  %40 = vmatprep.subr.mxu0 0.0
  %41 = vmatpush1.msra.mxu0 %v18
  %42 = vmatprep.subr.mxu0 0.0
  %43 = vmatpush1.msra.mxu0 %v19
  %44 = vmatprep.subr.mxu0 0.0
  %45 = vmatpush1.msra.mxu0 %v20
  %46 = vmatprep.subr.mxu0 0.0
  %47 = vmatpush1.msra.mxu0 %v21
  %48 = vmatprep.subr.mxu0 0.0
  %49 = vmatpush1.msra.mxu0 %v22
  %50 = vmatprep.subr.mxu0 0.0
  %51 = vmatpush1.msra.mxu0 %v23
  %52 = vmatprep.subr.mxu0 0.0
  %53 = vmatpush1.msra.mxu0 %v24
  %54 = vmatprep.subr.mxu0 0.0
  %55 = vmatpush1.msra.mxu0 %v25
  %56 = vmatprep.subr.mxu0 0.0
  %57 = vmatpush1.msra.mxu0 %v26
  %58 = vmatprep.subr.mxu0 0.0
  %59 = vmatpush1.msra.mxu0 %v27
  %60 = vmatprep.subr.mxu0 0.0
  %61 = vmatpush1.msra.mxu0 0.0
  %62 = vmatprep.subr.mxu0 0.0
  %63 = vmatpush1.msra.mxu0 0.0
  %64 = vmatprep.subr.mxu0 0.0
  %65 = vmatpush1.msra.mxu0 0.0
  %66 = vmatprep.subr.mxu0 0.0
  %67 = vmatpush1.msra.mxu0 0.0
  %68 = vmatprep.subr.mxu0 0.0
  %69 = vmatpush1.msra.mxu0 0.0
  %70 = vmatprep.subr.mxu0 0.0
  %71 = vmatpush1.msra.mxu0 0.0
  %72 = vmatprep.subr.mxu0 0.0
  %73 = vmatpush1.msra.mxu0 0.0
  %74 = vmatprep.subr.mxu0 0.0
  %75 = vmatpush1.msra.mxu0 0.0
  %76 = vmatprep.subr.mxu0 0.0
  %77 = vmatpush1.msra.mxu0 0.0
  %78 = vmatprep.subr.mxu0 0.0
  %79 = vmatpush1.msra.mxu0 0.0
  %80 = vmatprep.subr.mxu0 0.0
  %81 = vmatpush1.msra.mxu0 0.0
  %82 = vmatprep.subr.mxu0 0.0
  %83 = vmatpush1.msra.mxu0 0.0
  %84 = vmatprep.subr.mxu0 0.0
  %85 = vmatpush1.msra.mxu0 0.0
  %86 = vmatprep.subr.mxu0 0.0
  %87 = vmatpush1.msra.mxu0 0.0
  %88 = vmatprep.subr.mxu0 0.0
  %89 = vmatpush1.msra.mxu0 0.0
  %90 = vmatprep.subr.mxu0 0.0
  %91 = vmatpush1.msra.mxu0 0.0
  %92 = vmatprep.mubr.f32.mxu0 0.0
  %93 = vmatmul.mubr.f32.gmra.mrb[0].mxu0 %v11
  %v94 = vpop.f32.mrb[0].mxu0
  %v95 = vadd.f32 0.0, %v94
  %v96 = vpop.f32.mrb[0].mxu0
  %97 = vdwg.mxu0
  %v98 = vmax.f32 %v95, 0.0
  %vm99 = vcmask 31744
  %100 = vst.msk [vmem:[%s2] sm:$0xff] %vm99, %v98
  // Predicated region
  $region10: #{tpu_custom_call.1} parent=0 // pred_check
    _
  $region11: #{tpu_custom_call.1} parent=0 // pred_check_branch
    %102 = sbr.rel (0) target = $region13
  $region12: #{tpu_custom_call.1} parent=0 // pred_region
    _
  $region13: #{tpu_custom_call.1} parent=0 // pred_fallthru
    _
  // Predicated region
  $region14: #{tpu_custom_call.1} parent=0 // pred_check
    _
  $region15: #{tpu_custom_call.1} parent=0 // pred_check_branch
    %104 = sbr.rel (0) target = $region17
  $region16: #{tpu_custom_call.1} parent=0 // pred_region
    _
  $region17: #{tpu_custom_call.1} parent=0 // pred_fallthru
    _

</llo_original>
